<compile_context>
chip_gen: v6e
topology: v6e:2x2x1
jax: 0.10.0
libtpu: 0.0.40
codegen_flags: <defaults>
</compile_context>

<pallas_src>
import functools

import jax
import jax.numpy as jnp
from jax.experimental import pallas as pl
from jax.experimental.pallas import tpu as pltpu


def _l2norm_kernel(w_ref, x_ref, o_ref, *, eps):
    # x_ref: (BN, C, T) -- batch sub-block, channels on sublanes, spatial on lanes
    # w_ref: (C, 1)     -- per-channel weight, resident across the whole grid
    xf = x_ref[...].astype(jnp.float32)
    w = w_ref[...].astype(jnp.float32)                       # (C, 1)
    # PyTorch semantics: norm = sqrt(sum(x^2, dim=C)) + eps (eps AFTER sqrt).
    ssq = jnp.sum(xf * xf, axis=1, keepdims=True)            # (BN, 1, T)
    inv = pl.reciprocal(jnp.sqrt(ssq) + eps, approx=False)   # (BN, 1, T)
    # o = x * (w * 1/norm): one (1,C,1)x(BN,1,T) broadcast + one big multiply.
    o_ref[...] = (xf * (w[None, :, :] * inv)).astype(o_ref.dtype)


def _choose_tiles(n, c, hw, itemsize, target_block_bytes):
    """Pick (bn, tile_hw) so each grid step moves ~target_block_bytes of x."""
    # Spatial tile: either the full HW extent, or a multiple of 128 lanes.
    max_hw = max(128, target_block_bytes // max(1, c * itemsize))
    if hw <= max_hw:
        tile_hw = hw                                # full extent (always legal)
    else:
        tile_hw = max(128, (max_hw // 128) * 128)   # lane-dense multiple of 128
    # If one image's spatial extent fits in a single tile, also block over N so
    # small feature maps still issue large DMAs per grid step.
    bn = 1
    if tile_hw == hw:
        per_image = c * tile_hw * itemsize
        max_bn = max(1, target_block_bytes // max(1, per_image))
        for d in range(min(n, max_bn), 0, -1):
            if n % d == 0:
                bn = d
                break
    return bn, tile_hw


def l2norm(x, weight, *, eps=1e-10, target_block_bytes=2 * 1024 * 1024):
    """x: (N, C, H, W) array, weight: (C,) array. Returns array of x.dtype."""
    n, c, h, w = x.shape
    hw = h * w
    x_flat = x.reshape(n, c, hw)
    w2d = weight.reshape(c, 1)

    itemsize = jnp.dtype(x.dtype).itemsize
    bn, tile_hw = _choose_tiles(n, c, hw, itemsize, target_block_bytes)

    # Ragged spatial tail: pad up to a tile multiple (padded lanes read zeros;
    # their outputs are sliced away below). No divisibility assert.
    hw_pad = -(-hw // tile_hw) * tile_hw
    if hw_pad != hw:
        x_flat = jnp.pad(x_flat, ((0, 0), (0, 0), (0, hw_pad - hw)))

    grid = (n // bn, hw_pad // tile_hw)

    out = pl.pallas_call(
        functools.partial(_l2norm_kernel, eps=eps),
        out_shape=jax.ShapeDtypeStruct((n, c, hw_pad), x.dtype),
        grid_spec=pltpu.PrefetchScalarGridSpec(
            num_scalar_prefetch=0,
            grid=grid,
            in_specs=[
                # per-channel weight: same (C,1) block for every grid point
                pl.BlockSpec((c, 1), lambda b, t: (0, 0)),
                # (bn, C, tile_hw) tile of the input
                pl.BlockSpec((bn, c, tile_hw), lambda b, t: (b, 0, t)),
            ],
            out_specs=pl.BlockSpec((bn, c, tile_hw), lambda b, t: (b, 0, t)),
        ),
        compiler_params=pltpu.CompilerParams(
            # Both axes independent -> megacore sharding on v7x's 2 TCs.
            dimension_semantics=("parallel", "parallel"),
            # Lift v5e's 16 MiB scoped default; well within v7x's 64 MiB VMEM.
            vmem_limit_bytes=32 * 1024 * 1024,
        ),
    )(w2d, x_flat)

    if hw_pad != hw:
        out = out[:, :, :hw]
    return out.reshape(n, c, h, w)


def _reference(x, weight, eps):
    xf = x.astype(jnp.float32)
    norm = jnp.sqrt(jnp.sum(xf * xf, axis=1, keepdims=True)) + eps
    return (weight[None, :, None, None].astype(jnp.float32) * xf / norm).astype(x.dtype)


if __name__ == "__main__":
    # Module config: n_dims = C channels, scale = 20.0, eps = 1e-10.
    scale = 20.0
    eps = 1e-10
    key = jax.random.PRNGKey(0)

    # --- Test 1: small NCHW case (single large block, batch-blocked). ---
    N, C, H, W = 2, 4, 16, 16
    kx, kw, kx2 = jax.random.split(key, 3)
    x = jax.random.normal(kx, (N, C, H, W), dtype=jnp.float32)
    # mmdet uses constant_init(weight, scale); add a tiny deterministic
    # perturbation so the per-channel scaling is visible.
    weight = jnp.full((C,), scale, dtype=jnp.float32) + 0.01 * jax.random.normal(
        kw, (C,), dtype=jnp.float32
    )

    out = l2norm(x, weight, eps=eps)
    out = jax.block_until_ready(out)
    ref = _reference(x, weight, eps)
    assert out.shape == x.shape and out.dtype == x.dtype
    assert jnp.allclose(out, ref, atol=1e-5, rtol=1e-5)

    # --- Test 2: SSD-like ragged spatial size (38x38) with a small block
    # target to exercise the multi-tile + padded-tail path. ---
    N2, C2, H2, W2 = 1, 4, 38, 38
    x2 = jax.random.normal(kx2, (N2, C2, H2, W2), dtype=jnp.float32)
    w2 = jnp.full((C2,), scale, dtype=jnp.float32)
    out2 = l2norm(x2, w2, eps=eps, target_block_bytes=8 * 1024)
    out2 = jax.block_until_ready(out2)
    ref2 = _reference(x2, w2, eps)
    assert out2.shape == x2.shape and out2.dtype == x2.dtype
    assert jnp.allclose(out2, ref2, atol=1e-5, rtol=1e-5)

    print("KERNEL_OK")
</pallas_src>

<mosaic_0001>
module attributes {stable_mosaic.version = 11 : i64} {
  func.func @_l2norm_kernel(%arg0: i32, %arg1: i32, %arg2: memref<4x1xf32, #tpu.memory_space<vmem>>, %arg3: memref<2x4x256xf32, #tpu.memory_space<vmem>>, %arg4: memref<2x4x256xf32, #tpu.memory_space<vmem>>) attributes {dimension_semantics = [#tpu.dimension_semantics<parallel>, #tpu.dimension_semantics<parallel>], iteration_bounds = array<i64: 1, 1>, scalar_prefetch = 0 : i64, scratch_operands = 0 : i64, tpu.core_type = #tpu.core_type<tc>, window_params = [{pipeline_mode = #tpu.pipeline_mode<synchronous>, transform_indices = @transform_0, window_bounds = array<i64: 4, 1>}, {transform_indices = @transform_1, window_bounds = array<i64: 2, 4, 256>}, {transform_indices = @transform_2, window_bounds = array<i64: 2, 4, 256>}]} {
    %c0 = arith.constant 0 : index
    %c0_0 = arith.constant 0 : index
    %c0_1 = arith.constant 0 : index
    %0 = vector.load %arg3[%c0, %c0_0, %c0_1] : memref<2x4x256xf32, #tpu.memory_space<vmem>>, vector<2x4x256xf32>
    %c0_2 = arith.constant 0 : index
    %c0_3 = arith.constant 0 : index
    %1 = vector.load %arg2[%c0_2, %c0_3] : memref<4x1xf32, #tpu.memory_space<vmem>>, vector<4x1xf32>
    %2 = arith.mulf %0, %0 : vector<2x4x256xf32>
    %cst = arith.constant dense<0.000000e+00> : vector<2x256xf32>
    %3 = vector.multi_reduction <add>, %2, %cst [1] : vector<2x4x256xf32> to vector<2x256xf32>
    %4 = vector.shape_cast %3 : vector<2x256xf32> to vector<2x1x256xf32>
    %5 = math.sqrt %4 : vector<2x1x256xf32>
    %cst_4 = arith.constant 1.000000e-10 : f32
    %6 = vector.broadcast %cst_4 : f32 to vector<2x1x256xf32>
    %7 = arith.addf %5, %6 : vector<2x1x256xf32>
    %8 = tpu.reciprocal %7 : vector<2x1x256xf32> -> vector<2x1x256xf32>
    %9 = vector.shape_cast %1 : vector<4x1xf32> to vector<1x4x1xf32>
    %10 = vector.broadcast %9 : vector<1x4x1xf32> to vector<2x4x256xf32>
    %11 = vector.broadcast %8 : vector<2x1x256xf32> to vector<2x4x256xf32>
    %12 = arith.mulf %10, %11 : vector<2x4x256xf32>
    %13 = arith.mulf %0, %12 : vector<2x4x256xf32>
    %c0_5 = arith.constant 0 : index
    %c0_6 = arith.constant 0 : index
    %c0_7 = arith.constant 0 : index
    %14 = vector.load %arg4[%c0_5, %c0_6, %c0_7] : memref<2x4x256xf32, #tpu.memory_space<vmem>>, vector<2x4x256xf32>
    tpu.vector_store %arg4[%c0_5, %c0_6, %c0_7], %13 {strides = array<i32>} : memref<2x4x256xf32, #tpu.memory_space<vmem>>, vector<2x4x256xf32>,
    return
  }
  func.func @transform_0(%arg0: i32, %arg1: i32) -> (i32, i32) {
    %c0_i32 = arith.constant 0 : i32
    %c0_i32_0 = arith.constant 0 : i32
    %c0_i32_1 = arith.constant 0 : i32
    return %c0_i32, %c0_i32_0 : i32, i32
  }
  func.func @transform_1(%arg0: i32, %arg1: i32) -> (i32, i32, i32) {
    %c0_i32 = arith.constant 0 : i32
    %c0_i32_0 = arith.constant 0 : i32
    return %arg0, %c0_i32, %arg1 : i32, i32, i32
  }
  func.func @transform_2(%arg0: i32, %arg1: i32) -> (i32, i32, i32) {
    %c0_i32 = arith.constant 0 : i32
    %c0_i32_0 = arith.constant 0 : i32
    return %arg0, %c0_i32, %arg1 : i32, i32, i32
  }
}

</mosaic_0001>

<llo_original>
// kernel: tpu_custom_call.1
$region0: #{tpu_custom_call.1}
  #allocation0 [shape = 'u32[]', space=smem, size = 0x4, offset = 0x4, fixed_abs, tag = 'smem constant byte address 0x4 - core index']
  #allocation1 [shape = 'u32[144,128]{1,0:T(1,128)}', space=vmem, size = 0x12000, scoped, tag = 'internal scratch']
  %s0 = inlined_call_operand.vmem [shape: f32[4,1], index: 0, kind: input, shape index: {}]
  %s1 = inlined_call_operand.hbm [shape: f32[2,4,256], index: 1, kind: input, shape index: {}]
  %s2 = inlined_call_operand.hbm [shape: f32[2,4,256], index: 2, kind: output, shape index: {}]
  %s3 = sld [smem:[#allocation0]]
  $region22: #{tpu_custom_call.1} parent=0
    _
  %s5 = ssub.s32 1, %s3
  %s6 = scalar_select 0, %s5, %s3
  $region1: #{tpu_custom_call.1} parent=0
    #allocation2 [shape = 'u8[8192]{0}', space=vmem, size = 0x2000, scoped, tag = 'input window, operand 1, single buffered']
    #allocation3 [shape = 's32[1]{0}', space=sflag, size = 0x4, scoped, tag = 'scoped memory for tpu_custom_call.1']
    #allocation4 [shape = 's32[1]{0}', space=sflag, size = 0x4, scoped, tag = 'scoped memory for tpu_custom_call.1']
    #allocation5 [shape = 'u8[8192]{0}', space=vmem, size = 0x2000, scoped, tag = 'output window, operand 0, single buffered']
    %7 = vsyncpa [#allocation3], 0
    %8 = vsyncpa [#allocation4], 0
    // Predicated region
    $region2: #{tpu_custom_call.1} parent=1 // pred_check
      _
    $region3: #{tpu_custom_call.1} parent=1 // pred_check_branch
      %10 = sbr.rel (0) target = $region5
    $region4: #{tpu_custom_call.1} parent=1 // pred_region
      _
    $region5: #{tpu_custom_call.1} parent=1 // pred_fallthru
      _
    // Predicated region
    $region6: #{tpu_custom_call.1} parent=1 // pred_check
      _
    $region7: #{tpu_custom_call.1} parent=1 // pred_check_branch
      %12 = sbr.rel (0) target = $region9
    $region8: #{tpu_custom_call.1} parent=1 // pred_region
      %s14 = ssub.s32 256, 256
      %15 = vsyncadd [#allocation3], %s14
      %s16 = sshll.u32 [#allocation2], 4
      %s17 = int_to_ptr.vmem [resolvable:$true] %s16
      %22 = dma.hbm_to_vmem [thread:$0]  %s1, 256, %s17, [#allocation3], 128, 128, 8
    $region9: #{tpu_custom_call.1} parent=1 // pred_fallthru
      _
    // Predicated region
    $region10: #{tpu_custom_call.1} parent=1 // pred_check
      _
    $region11: #{tpu_custom_call.1} parent=1 // pred_check_branch
      %24 = sbr.rel (0) target = $region13
    $region12: #{tpu_custom_call.1} parent=1 // pred_region
      %25 = dma.done [#allocation3], 256
    $region13: #{tpu_custom_call.1} parent=1 // pred_fallthru
      _
    %v26 = vld [vmem:[#allocation2] sm:$0xff]
    %v27 = vld [vmem:[#allocation2 + $0x8] sm:$0xff]
    %v28 = vld [vmem:[%s0] sm:$0xf]
    %v29 = vmul.f32 %v26, %v26
    %v30 = vmul.f32 %v27, %v27
    %v33 = vcombine.high %v29, %v29
    %v34 = vcombine.high %v30, %v30
    %vm37 = vcmask 1043456
    %v38 = vsel %vm37, %v29, 0.0
    %v39 = vrot.slane %v38, 4
    %v40 = vadd.f32 %v38, %v39
    %v41 = vrot.slane %v40, 2
    %v42 = vadd.f32 %v40, %v41
    %v43 = vrot.slane %v42, 1
    %v44 = vadd.f32 %v42, %v43
    %v45 = vsel %vm37, %v33, 0.0
    %v46 = vrot.slane %v45, 4
    %v47 = vadd.f32 %v45, %v46
    %v48 = vrot.slane %v47, 2
    %v49 = vadd.f32 %v47, %v48
    %v50 = vrot.slane %v49, 1
    %v51 = vadd.f32 %v49, %v50
    %v52 = vsel %vm37, %v30, 0.0
    %v53 = vrot.slane %v52, 4
    %v54 = vadd.f32 %v52, %v53
    %v55 = vrot.slane %v54, 2
    %v56 = vadd.f32 %v54, %v55
    %v57 = vrot.slane %v56, 1
    %v58 = vadd.f32 %v56, %v57
    %v59 = vsel %vm37, %v34, 0.0
    %v60 = vrot.slane %v59, 4
    %v61 = vadd.f32 %v59, %v60
    %v62 = vrot.slane %v61, 2
    %v63 = vadd.f32 %v61, %v62
    %v64 = vrot.slane %v63, 1
    %v65 = vadd.f32 %v63, %v64
    %v66 = vrsqrt.pop %v44
    %v67 = vmul.f32 %v44, %v66
    %vm68 = vcmp.eq.f32.partialorder %v44, inf
    %v69 = vsel %vm68, %v44, %v67
    %vm70 = vcmp.eq.f32.partialorder %v44, 0.0
    %v71 = vand.u32 %v44, 2147483648
    %v72 = vsel %vm70, %v71, %v69
    %v73 = vrsqrt.pop %v51
    %v74 = vmul.f32 %v51, %v73
    %vm75 = vcmp.eq.f32.partialorder %v51, inf
    %v76 = vsel %vm75, %v51, %v74
    %vm77 = vcmp.eq.f32.partialorder %v51, 0.0
    %v78 = vand.u32 %v51, 2147483648
    %v79 = vsel %vm77, %v78, %v76
    %v80 = vrsqrt.pop %v58
    %v81 = vmul.f32 %v58, %v80
    %vm82 = vcmp.eq.f32.partialorder %v58, inf
    %v83 = vsel %vm82, %v58, %v81
    %vm84 = vcmp.eq.f32.partialorder %v58, 0.0
    %v85 = vand.u32 %v58, 2147483648
    %v86 = vsel %vm84, %v85, %v83
    %v87 = vrsqrt.pop %v65
    %v88 = vmul.f32 %v65, %v87
    %vm89 = vcmp.eq.f32.partialorder %v65, inf
    %v90 = vsel %vm89, %v65, %v88
    %vm91 = vcmp.eq.f32.partialorder %v65, 0.0
    %v92 = vand.u32 %v65, 2147483648
    %v93 = vsel %vm91, %v92, %v90
    %v94 = vadd.f32 %v72, 1e-10
    %v95 = vadd.f32 %v79, 1e-10
    %v96 = vadd.f32 %v86, 1e-10
    %v97 = vadd.f32 %v93, 1e-10
    %v98 = vrcp.pop %v94
    %v99 = vrcp.pop %v95
    %v100 = vrcp.pop %v96
    %v101 = vrcp.pop %v97
    %103 = vset.pattern.permute.xlu0 0
    %104 = vperm.xlu0 %103, %v28
    %v105 = vpop.permute.xlu0 %104
    %v107 = vmul.f32 %v105, %v98
    %v108 = vmul.f32 %v105, %v99
    %v109 = vmul.f32 %v105, %v100
    %v110 = vmul.f32 %v105, %v101
    %v115 = vcombine.low %v107, %v108
    %v116 = vcombine.low %v109, %v110
    %v119 = vmul.f32 %v26, %v115
    %v120 = vmul.f32 %v27, %v116
    %121 = vst [vmem:[#allocation5] sm:$0xff] %v119
    %122 = vst [vmem:[#allocation5 + $0x8] sm:$0xff] %v120
    // Predicated region
    $region14: #{tpu_custom_call.1} parent=1 // pred_check
      _
    $region15: #{tpu_custom_call.1} parent=1 // pred_check_branch
      %124 = sbr.rel (0) target = $region17
    $region16: #{tpu_custom_call.1} parent=1 // pred_region
      %s126 = ssub.s32 256, 256
      %127 = vsyncadd [#allocation4], %s126
      %s128 = sshll.u32 [#allocation5], 4
      %s129 = int_to_ptr.vmem [resolvable:$true] %s128
      %134 = dma.vmem_to_hbm [thread:$0]  %s129, 256, %s2, [#allocation4], 128, 128, 8
    $region17: #{tpu_custom_call.1} parent=1 // pred_fallthru
      _
    // Predicated region
    $region18: #{tpu_custom_call.1} parent=1 // pred_check
      _
    $region19: #{tpu_custom_call.1} parent=1 // pred_check_branch
      %136 = sbr.rel (0) target = $region21
    $region20: #{tpu_custom_call.1} parent=1 // pred_region
      %137 = dma.done [#allocation4], 256
    $region21: #{tpu_custom_call.1} parent=1 // pred_fallthru
      _
    %138 = vsyncpa [#allocation3], 1
    %139 = vsyncpa [#allocation4], 1

</llo_original>
